<compile_context>
chip_gen: v6e
topology: v6e:2x2x1
jax: 0.10.0
libtpu: 0.0.40
codegen_flags: <defaults>
</compile_context>

<pallas_src>
import jax
import jax.numpy as jnp
from jax.experimental import pallas as pl
from jax.experimental.pallas import tpu as pltpu


def _custom_loss_kernel(yy_ref, out_ref):
    # yy_ref: (2,) f32 in SMEM -> [y_true, y_hat]; out_ref: (1,) f32 in SMEM.
    # Pure scalar-ALU work; no vector lanes involved.
    yt = yy_ref[0]
    yh = yy_ref[1]

    diff = yt - yh
    mse = diff * diff

    # Strictly opposite signs — explicit compares (robust to product underflow).
    opp = jnp.logical_or(
        jnp.logical_and(yt < 0.0, yh > 0.0),
        jnp.logical_and(yh < 0.0, yt > 0.0),
    )
    penalty = jnp.where(opp, jnp.float32(100.0), jnp.float32(0.0))

    out_ref[0] = mse + penalty


def custom_loss(y_true, y_hat):
    """Pallas equivalent of Custom_loss.forward for scalar inputs."""
    yt = jnp.asarray(y_true, dtype=jnp.float32)
    yh = jnp.asarray(y_hat, dtype=jnp.float32)
    if yt.size != 1 or yh.size != 1:
        # The PyTorch module's `if y_true < 0 < y_hat ...` only works on
        # single-element tensors; enforce the same contract here.
        raise ValueError("Custom_loss expects single-element (scalar) inputs.")

    packed = jnp.stack([yt.reshape(()), yh.reshape(())])  # (2,) f32

    out = pl.pallas_call(
        _custom_loss_kernel,
        out_shape=jax.ShapeDtypeStruct((1,), jnp.float32),
        in_specs=[pl.BlockSpec(memory_space=pltpu.MemorySpace.SMEM)],
        out_specs=pl.BlockSpec(memory_space=pltpu.MemorySpace.SMEM),
    )(packed)
    return out.reshape(())  # 0-d scalar, matching the PyTorch return


def _ref_loss(y_true, y_hat):
    yt = jnp.asarray(y_true, dtype=jnp.float32)
    yh = jnp.asarray(y_hat, dtype=jnp.float32)
    loss = (yt - yh) ** 2
    opp = jnp.logical_or(
        jnp.logical_and(yt < 0, yh > 0),
        jnp.logical_and(yh < 0, yt > 0),
    )
    return loss + jnp.where(opp, 100.0, 0.0)


if __name__ == "__main__":
    key = jax.random.PRNGKey(0)
    k1, k2 = jax.random.split(key)

    # Deterministic scalar example inputs (the module's implied contract).
    y_true = jax.random.normal(k1, (), dtype=jnp.float32)
    y_hat = -jax.random.normal(k2, (), dtype=jnp.float32)

    loss = custom_loss(y_true, y_hat)
    jax.block_until_ready(loss)
    assert jnp.allclose(loss, _ref_loss(y_true, y_hat), atol=1e-5), (
        loss, _ref_loss(y_true, y_hat))

    # Penalty branch (opposite signs).
    loss_pen = custom_loss(jnp.float32(-0.5), jnp.float32(0.25))
    jax.block_until_ready(loss_pen)
    assert jnp.allclose(loss_pen, (-0.5 - 0.25) ** 2 + 100.0, atol=1e-5), loss_pen

    # No-penalty branch with a zero (boundary: 0 is not strictly opposite).
    loss_zero = custom_loss(jnp.float32(0.0), jnp.float32(0.75))
    jax.block_until_ready(loss_zero)
    assert jnp.allclose(loss_zero, 0.75 ** 2, atol=1e-5), loss_zero

    # Underflow-robustness: tiny opposite-signed values must still trigger +100.
    loss_tiny = custom_loss(jnp.float32(1e-30), jnp.float32(-1e-30))
    jax.block_until_ready(loss_tiny)
    assert jnp.allclose(loss_tiny, 100.0, atol=1e-5), loss_tiny

    print("KERNEL_OK")
</pallas_src>

<mosaic_0001>
module attributes {stable_mosaic.version = 11 : i64} {
  func.func @_custom_loss_kernel(%arg0: memref<2xf32, #tpu.memory_space<smem>>, %arg1: memref<1xf32, #tpu.memory_space<smem>>) attributes {dimension_semantics = [], scalar_prefetch = 0 : i64, scratch_operands = 0 : i64, tpu.core_type = #tpu.core_type<tc>} {
    %c0 = arith.constant 0 : index
    %0 = memref.load %arg0[%c0] : memref<2xf32, #tpu.memory_space<smem>>
    %c1 = arith.constant 1 : index
    %1 = memref.load %arg0[%c1] : memref<2xf32, #tpu.memory_space<smem>>
    %2 = arith.subf %0, %1 : f32
    %3 = arith.mulf %2, %2 : f32
    %cst = arith.constant 0.000000e+00 : f32
    %4 = arith.cmpf olt, %0, %cst : f32
    %cst_0 = arith.constant 0.000000e+00 : f32
    %5 = arith.cmpf ogt, %1, %cst_0 : f32
    %6 = arith.andi %4, %5 : i1
    %cst_1 = arith.constant 0.000000e+00 : f32
    %7 = arith.cmpf olt, %1, %cst_1 : f32
    %cst_2 = arith.constant 0.000000e+00 : f32
    %8 = arith.cmpf ogt, %0, %cst_2 : f32
    %9 = arith.andi %7, %8 : i1
    %10 = arith.ori %6, %9 : i1
    %cst_3 = arith.constant 1.000000e+02 : f32
    %cst_4 = arith.constant 0.000000e+00 : f32
    %11 = arith.select %10, %cst_3, %cst_4 : f32
    %12 = arith.addf %3, %11 : f32
    %c0_5 = arith.constant 0 : index
    %13 = memref.load %arg1[%c0_5] : memref<1xf32, #tpu.memory_space<smem>>
    memref.store %12, %arg1[%c0_5] : memref<1xf32, #tpu.memory_space<smem>>
    return
  }
}

</mosaic_0001>

<llo_original>
// kernel: tpu_custom_call.1
$region0: #{tpu_custom_call.1}
  #allocation0 [shape = 'u32[]', space=smem, size = 0x4, offset = 0x4, fixed_abs, tag = 'smem constant byte address 0x4 - core index']
  #allocation1 [shape = 'u32[144,128]{1,0:T(1,128)}', space=vmem, size = 0x12000, scoped, tag = 'internal scratch']
  %s0 = inlined_call_operand.hbm [shape: f32[2], index: 0, kind: input, shape index: {}]
  %s1 = inlined_call_operand.hbm [shape: f32[1], index: 1, kind: output, shape index: {}]
  %s2 = sld [smem:[#allocation0]]
  $region18: #{tpu_custom_call.1} parent=0
    _
  %s4 = ssub.s32 1, %s2
  %s5 = scalar_select 0, %s4, %s2
  $region1: #{tpu_custom_call.1} parent=0
    #allocation2 [shape = 'u8[512]{0}', space=smem, size = 0x200, scoped, tag = 'input window, operand 0, single buffered']
    #allocation3 [shape = 's32[1]{0}', space=sflag, size = 0x4, scoped, tag = 'scoped memory for tpu_custom_call.1']
    #allocation4 [shape = 's32[1]{0}', space=sflag, size = 0x4, scoped, tag = 'scoped memory for tpu_custom_call.1']
    #allocation5 [shape = 'u8[512]{0}', space=smem, size = 0x200, scoped, tag = 'output window, operand 0, single buffered']
    %6 = vsyncpa [#allocation3], 0
    %7 = vsyncpa [#allocation4], 0
    // Predicated region
    $region2: #{tpu_custom_call.1} parent=1 // pred_check
      _
    $region3: #{tpu_custom_call.1} parent=1 // pred_check_branch
      %9 = sbr.rel (0) target = $region5
    $region4: #{tpu_custom_call.1} parent=1 // pred_region
      %s11 = ssub.s32 16, 16
      %12 = vsyncadd [#allocation3], %s11
      %15 = dma.hbm_to_smem %s0, 16, [#allocation2], [#allocation3]
    $region5: #{tpu_custom_call.1} parent=1 // pred_fallthru
      _
    // Predicated region
    $region6: #{tpu_custom_call.1} parent=1 // pred_check
      _
    $region7: #{tpu_custom_call.1} parent=1 // pred_check_branch
      %17 = sbr.rel (0) target = $region9
    $region8: #{tpu_custom_call.1} parent=1 // pred_region
      %18 = dma.done [#allocation3], 16
    $region9: #{tpu_custom_call.1} parent=1 // pred_fallthru
      _
    %19 = sfence
    %s20 = sld [smem:[#allocation2]]
    %s21 = sld [smem:[#allocation2 + $0x1]]
    %s22 = ssub.f32 %s20, %s21
    %s23 = smul.f32 %s22, %s22
    %p24 = scmp.lt.f32.partialorder %s20, 0.0
    %p25 = scmp.gt.f32.partialorder %s21, 0.0
    %p26 = pnand %p24, %p25
    %p27 = pneg %p26
    %p28 = scmp.lt.f32.partialorder %s21, 0.0
    %p29 = scmp.gt.f32.partialorder %s20, 0.0
    %p30 = pnand %p28, %p29
    %p31 = pneg %p30
    %p32 = por %p27, %p31
    %s33 = scalar_select %p32, 100.0, 0.0
    %s34 = sadd.f32 %s23, %s33
    %s35 = scalar_lea.smem [#allocation5], 0
    %36 = sst [smem:[%s35]] %s34
    // Predicated region
    $region10: #{tpu_custom_call.1} parent=1 // pred_check
      _
    $region11: #{tpu_custom_call.1} parent=1 // pred_check_branch
      %38 = sbr.rel (0) target = $region13
    $region12: #{tpu_custom_call.1} parent=1 // pred_region
      %s40 = ssub.s32 16, 16
      %41 = vsyncadd [#allocation4], %s40
      %44 = dma.smem_to_hbm [#allocation5], 16, %s1, [#allocation4]
    $region13: #{tpu_custom_call.1} parent=1 // pred_fallthru
      _
    // Predicated region
    $region14: #{tpu_custom_call.1} parent=1 // pred_check
      _
    $region15: #{tpu_custom_call.1} parent=1 // pred_check_branch
      %46 = sbr.rel (0) target = $region17
    $region16: #{tpu_custom_call.1} parent=1 // pred_region
      %47 = dma.done [#allocation4], 16
    $region17: #{tpu_custom_call.1} parent=1 // pred_fallthru
      _
    %48 = sfence
    %49 = vsyncpa [#allocation3], 1
    %50 = vsyncpa [#allocation4], 1

</llo_original>
